<compile_context>
chip_gen: v5e
topology: v5e:2x2
jax: 0.10.0
libtpu: 0.0.40
codegen_flags: <defaults>
</compile_context>

<pallas_src>
import jax
import jax.numpy as jnp
from jax.experimental import pallas as pl
from jax.experimental.pallas import tpu as pltpu


def _round_up(x, m):
    return ((x + m - 1) // m) * m


def _cdiv(a, b):
    return (a + b - 1) // b


# ---------------------------------------------------------------------------
# Kernel body: one batch tile through the full 3-layer MLP (weights resident).
# ---------------------------------------------------------------------------
def _decoder_kernel(zc_ref, w1_ref, b1_ref, w2_ref, b2_ref, w3_ref, b3_ref,
                    out_ref):
    wdt = w1_ref.dtype  # bf16 fast path casts activations; f32 -> no-op cast.
    # Layer 1 (concat already fused in the wrapper) + LeakyReLU(0.2).
    h = (jnp.dot(zc_ref[...].astype(wdt), w1_ref[...],
                 preferred_element_type=jnp.float32) + b1_ref[...])
    h = jnp.maximum(h, 0.2 * h)
    # Layer 2 + LeakyReLU(0.2).
    h = (jnp.dot(h.astype(wdt), w2_ref[...],
                 preferred_element_type=jnp.float32) + b2_ref[...])
    h = jnp.maximum(h, 0.2 * h)
    # Output layer (no activation).
    out_ref[...] = (jnp.dot(h.astype(wdt), w3_ref[...],
                            preferred_element_type=jnp.float32)
                    + b3_ref[...]).astype(out_ref.dtype)


# ---------------------------------------------------------------------------
# One-time parameter preparation (hoisted out of the forward hot path).
# ---------------------------------------------------------------------------
def prepare_decoder_params(params, *, weight_dtype=jnp.float32):
    """Pad feature dims to multiples of 128 (lane-dense) and cast weights once.

    params: dict with w1 (L+C,H), b1 (1,H), w2 (H,H), b2 (1,H), w3 (H,O),
            b3 (1,O)  -- PyTorch Linear weights stored transposed for x@W+b.
    """
    w1, b1 = params["w1"], params["b1"]
    w2, b2 = params["w2"], params["b2"]
    w3, b3 = params["w3"], params["b3"]
    LC, H = w1.shape
    O = w3.shape[1]
    Hp = _round_up(H, 128)
    Op = _round_up(O, 128)

    def pad2(a, rows, cols, dtype):
        a = a.astype(dtype)
        return jnp.pad(a, ((0, rows - a.shape[0]), (0, cols - a.shape[1])))

    return {
        "w1": pad2(w1, LC, Hp, weight_dtype),   # (L+C, Hp)
        "b1": pad2(b1, 1, Hp, jnp.float32),     # (1,   Hp)
        "w2": pad2(w2, Hp, Hp, weight_dtype),   # (Hp,  Hp)
        "b2": pad2(b2, 1, Hp, jnp.float32),     # (1,   Hp)
        "w3": pad2(w3, Hp, Op, weight_dtype),   # (Hp,  Op)
        "b3": pad2(b3, 1, Op, jnp.float32),     # (1,   Op)
        "H": H, "O": O, "in_features": LC,
    }


# ---------------------------------------------------------------------------
# Forward pass.
# ---------------------------------------------------------------------------
def decoder_forward(z, condition, params, *, batch_tile=None):
    """Pallas-backed Decoder forward.

    z:         (B, latent_dim)    float32
    condition: (B, condition_dim) float32
    params:    output of `prepare_decoder_params` (raw params also accepted
               and will be prepared on the fly).
    """
    if "H" not in params:  # raw (unprepared) params -> prepare once here.
        params = prepare_decoder_params(params)

    B, L = z.shape
    Bc, C = condition.shape
    assert Bc == B
    LC = L + C
    assert params["in_features"] == LC

    w1, b1 = params["w1"], params["b1"]
    w2, b2 = params["w2"], params["b2"]
    w3, b3 = params["w3"], params["b3"]
    H, O = params["H"], params["O"]
    Hp = w2.shape[1]
    Op = w3.shape[1]
    weight_dtype = w1.dtype

    # ---- Generation-aware VMEM budget & default batch tile. ----------------
    try:
        vmem_cap = int(pltpu.get_tpu_info().vmem_capacity_bytes)
    except Exception:
        vmem_cap = 64 << 20
    if vmem_cap <= (64 << 20):
        # v7x: 64 MiB/TC -> leave compiler scratch headroom.
        vmem_budget = 52 << 20
        if batch_tile is None:
            batch_tile = 512
    else:
        # v5e / v6e: 128 MiB -> use ~80% of it, bigger batch tiles.
        vmem_budget = int(vmem_cap * 0.8)
        if batch_tile is None:
            batch_tile = 1024

    itemsize_w = jnp.dtype(weight_dtype).itemsize
    weight_bytes = ((w1.size + w2.size + w3.size) * itemsize_w
                    + (b1.size + b2.size + b3.size) * 4)  # single-buffered

    def vmem_need(tb):
        act = 2 * tb * (LC + Op) * 4   # double-buffered input/output tiles
        hid = 2 * tb * Hp * 4          # intermediate activations (vregs/VMEM)
        return act + hid + weight_bytes

    # ---- Balanced batch tiling: near-equal tiles, each a multiple of 8. ----
    n_tiles = max(1, _cdiv(B, batch_tile))
    TB = _round_up(_cdiv(B, n_tiles), 8)
    # Megacore (v7x, 2 TCs): guarantee >=2 grid steps so "parallel" shards.
    if _cdiv(B, TB) < 2 and TB > 8:
        TB = _round_up(_cdiv(B, 2), 8)
    # Respect the VMEM budget (shrink TB if needed).
    while vmem_need(TB) + (4 << 20) > vmem_budget and TB > 8:
        TB = max(8, _round_up(TB // 2, 8))
    # TODO(synk): for hidden_dim >= ~2048 the all-resident W2/W3 design should
    # fall back to feature-dim (N) tiling of W2/W3 on a second grid axis.

    Bp = _round_up(B, TB)
    grid = (Bp // TB,)

    # ---- Fuse the concat in the wrapper (trivially cheap) and batch-pad. ---
    zc = jnp.concatenate([z.astype(jnp.float32),
                          condition.astype(jnp.float32)], axis=1)
    zc = jnp.pad(zc, ((0, Bp - B), (0, 0)))

    vmem_limit = int(min(max(vmem_need(TB) + weight_bytes + (8 << 20),
                             32 << 20), vmem_budget))
    flops = 2 * Bp * (LC * Hp + Hp * Hp + Hp * Op)
    bytes_accessed = 4 * Bp * (LC + Op) + weight_bytes

    def act_spec(cols):
        return pl.BlockSpec((TB, cols), lambda i: (i, 0))

    def run(weight_pipeline_mode):
        def res_spec(shape):
            # Resident weights/biases: constant index_map, DMA'd once.
            return pl.BlockSpec(shape, lambda i: (0, 0),
                                pipeline_mode=weight_pipeline_mode)

        return pl.pallas_call(
            _decoder_kernel,
            out_shape=jax.ShapeDtypeStruct((Bp, Op), jnp.float32),
            grid=grid,
            in_specs=[
                act_spec(LC),           # zc tile (batch-pipelined)
                res_spec((LC, Hp)),     # w1
                res_spec((1, Hp)),      # b1
                res_spec((Hp, Hp)),     # w2
                res_spec((1, Hp)),      # b2
                res_spec((Hp, Op)),     # w3
                res_spec((1, Op)),      # b3
            ],
            out_specs=act_spec(Op),
            compiler_params=pltpu.CompilerParams(
                dimension_semantics=("parallel",),  # shard batch across TCs
                vmem_limit_bytes=vmem_limit),
            cost_estimate=pl.CostEstimate(
                flops=int(flops), transcendentals=0,
                bytes_accessed=int(bytes_accessed)),
        )(zc, w1, b1, w2, b2, w3, b3)

    try:
        # Single-buffer the resident weights (they never change across steps).
        out_p = run(pl.Buffered(1))
    except Exception:
        # Fallback for JAX versions without single-buffered pipeline_mode.
        out_p = run(None)

    return out_p[:B, :O]


# ---------------------------------------------------------------------------
# Synthetic init + plain-JAX reference (for the self-check below).
# ---------------------------------------------------------------------------
def init_decoder_params(key, latent_dim, hidden_dim, output_dim,
                        condition_dim):
    in1 = latent_dim + condition_dim
    k1, k2, k3, k4, k5, k6 = jax.random.split(key, 6)

    def uniform(k, shape, fan_in):
        bound = 1.0 / jnp.sqrt(fan_in)
        return jax.random.uniform(k, shape, jnp.float32, -bound, bound)

    return {
        "w1": uniform(k1, (in1, hidden_dim), in1),
        "b1": uniform(k2, (1, hidden_dim), in1),
        "w2": uniform(k3, (hidden_dim, hidden_dim), hidden_dim),
        "b2": uniform(k4, (1, hidden_dim), hidden_dim),
        "w3": uniform(k5, (hidden_dim, output_dim), hidden_dim),
        "b3": uniform(k6, (1, output_dim), hidden_dim),
    }


def _reference_forward(z, condition, params):
    zc = jnp.concatenate([z, condition], axis=1)
    h = zc @ params["w1"] + params["b1"]
    h = jnp.where(h > 0, h, 0.2 * h)
    h = h @ params["w2"] + params["b2"]
    h = jnp.where(h > 0, h, 0.2 * h)
    return h @ params["w3"] + params["b3"]


if __name__ == "__main__":
    latent_dim = 8
    condition_dim = 4
    hidden_dim = 32
    output_dim = 16

    key = jax.random.PRNGKey(0)
    kz, kc, kp = jax.random.split(key, 3)
    params = init_decoder_params(kp, latent_dim, hidden_dim, output_dim,
                                 condition_dim)
    prepared = prepare_decoder_params(params)  # pad/cast once, reuse per call

    # Case 1: small batch (module-consistent shapes).
    batch = 2
    z = jax.random.normal(kz, (batch, latent_dim), jnp.float32)
    cond = jax.random.normal(kc, (batch, condition_dim), jnp.float32)
    x_hat = jax.block_until_ready(decoder_forward(z, cond, prepared))
    ref = _reference_forward(z, cond, params)
    assert x_hat.shape == (batch, output_dim)
    assert jnp.allclose(x_hat, ref, atol=1e-5, rtol=1e-5)

    # Case 2: larger, non-tile-aligned batch (exercises balanced tiling and
    # the >=2-grid-step megacore path).
    batch2 = 600
    kz2, kc2 = jax.random.split(jax.random.PRNGKey(1))
    z2 = jax.random.normal(kz2, (batch2, latent_dim), jnp.float32)
    cond2 = jax.random.normal(kc2, (batch2, condition_dim), jnp.float32)
    x_hat2 = jax.block_until_ready(decoder_forward(z2, cond2, prepared))
    ref2 = _reference_forward(z2, cond2, params)
    assert x_hat2.shape == (batch2, output_dim)
    assert jnp.allclose(x_hat2, ref2, atol=1e-5, rtol=1e-5)

    print("KERNEL_OK")
</pallas_src>

<mosaic_0001>
module attributes {stable_mosaic.version = 11 : i64} {
  func.func @_decoder_kernel(%arg0: i32, %arg1: memref<8x12xf32, #tpu.memory_space<vmem>>, %arg2: memref<12x128xf32, #tpu.memory_space<vmem>>, %arg3: memref<1x128xf32, #tpu.memory_space<vmem>>, %arg4: memref<128x128xf32, #tpu.memory_space<vmem>>, %arg5: memref<1x128xf32, #tpu.memory_space<vmem>>, %arg6: memref<128x128xf32, #tpu.memory_space<vmem>>, %arg7: memref<1x128xf32, #tpu.memory_space<vmem>>, %arg8: memref<8x128xf32, #tpu.memory_space<vmem>>) attributes {dimension_semantics = [#tpu.dimension_semantics<parallel>], iteration_bounds = array<i64: 1>, scalar_prefetch = 0 : i64, scratch_operands = 0 : i64, tpu.core_type = #tpu.core_type<tc>, window_params = [{transform_indices = @transform_0, window_bounds = array<i64: 8, 12>}, {pipeline_mode = #tpu.pipeline_mode<synchronous>, transform_indices = @transform_1, window_bounds = array<i64: 12, 128>}, {pipeline_mode = #tpu.pipeline_mode<synchronous>, transform_indices = @transform_2, window_bounds = array<i64: 1, 128>}, {pipeline_mode = #tpu.pipeline_mode<synchronous>, transform_indices = @transform_3, window_bounds = array<i64: 128, 128>}, {pipeline_mode = #tpu.pipeline_mode<synchronous>, transform_indices = @transform_4, window_bounds = array<i64: 1, 128>}, {pipeline_mode = #tpu.pipeline_mode<synchronous>, transform_indices = @transform_5, window_bounds = array<i64: 128, 128>}, {pipeline_mode = #tpu.pipeline_mode<synchronous>, transform_indices = @transform_6, window_bounds = array<i64: 1, 128>}, {transform_indices = @transform_7, window_bounds = array<i64: 8, 128>}]} {
    %c0 = arith.constant 0 : index
    %c0_0 = arith.constant 0 : index
    %0 = vector.load %arg1[%c0, %c0_0] : memref<8x12xf32, #tpu.memory_space<vmem>>, vector<8x12xf32>
    %c0_1 = arith.constant 0 : index
    %c0_2 = arith.constant 0 : index
    %1 = vector.load %arg2[%c0_1, %c0_2] : memref<12x128xf32, #tpu.memory_space<vmem>>, vector<12x128xf32>
    %cst = arith.constant dense<0.000000e+00> : vector<8x128xf32>
    %2 = tpu.matmul %0, %1, %cst {dimension_numbers = #tpu.dot_dimension_numbers<[1], [0], [0], [1], [0, 0, 1, 1], [], []>} : vector<8x12xf32>, vector<12x128xf32>, vector<8x128xf32> -> vector<8x128xf32>
    %c0_3 = arith.constant 0 : index
    %c0_4 = arith.constant 0 : index
    %3 = vector.load %arg3[%c0_3, %c0_4] : memref<1x128xf32, #tpu.memory_space<vmem>>, vector<1x128xf32>
    %4 = vector.broadcast %3 : vector<1x128xf32> to vector<8x128xf32>
    %5 = arith.addf %2, %4 : vector<8x128xf32>
    %cst_5 = arith.constant 2.000000e-01 : f32
    %6 = vector.broadcast %cst_5 : f32 to vector<8x128xf32>
    %7 = arith.mulf %6, %5 : vector<8x128xf32>
    %8 = arith.maximumf %5, %7 : vector<8x128xf32>
    %c0_6 = arith.constant 0 : index
    %c0_7 = arith.constant 0 : index
    %9 = vector.load %arg4[%c0_6, %c0_7] : memref<128x128xf32, #tpu.memory_space<vmem>>, vector<128x128xf32>
    %cst_8 = arith.constant dense<0.000000e+00> : vector<8x128xf32>
    %10 = tpu.matmul %8, %9, %cst_8 {dimension_numbers = #tpu.dot_dimension_numbers<[1], [0], [0], [1], [0, 0, 1, 1], [], []>} : vector<8x128xf32>, vector<128x128xf32>, vector<8x128xf32> -> vector<8x128xf32>
    %c0_9 = arith.constant 0 : index
    %c0_10 = arith.constant 0 : index
    %11 = vector.load %arg5[%c0_9, %c0_10] : memref<1x128xf32, #tpu.memory_space<vmem>>, vector<1x128xf32>
    %12 = vector.broadcast %11 : vector<1x128xf32> to vector<8x128xf32>
    %13 = arith.addf %10, %12 : vector<8x128xf32>
    %cst_11 = arith.constant 2.000000e-01 : f32
    %14 = vector.broadcast %cst_11 : f32 to vector<8x128xf32>
    %15 = arith.mulf %14, %13 : vector<8x128xf32>
    %16 = arith.maximumf %13, %15 : vector<8x128xf32>
    %c0_12 = arith.constant 0 : index
    %c0_13 = arith.constant 0 : index
    %17 = vector.load %arg6[%c0_12, %c0_13] : memref<128x128xf32, #tpu.memory_space<vmem>>, vector<128x128xf32>
    %cst_14 = arith.constant dense<0.000000e+00> : vector<8x128xf32>
    %18 = tpu.matmul %16, %17, %cst_14 {dimension_numbers = #tpu.dot_dimension_numbers<[1], [0], [0], [1], [0, 0, 1, 1], [], []>} : vector<8x128xf32>, vector<128x128xf32>, vector<8x128xf32> -> vector<8x128xf32>
    %c0_15 = arith.constant 0 : index
    %c0_16 = arith.constant 0 : index
    %19 = vector.load %arg7[%c0_15, %c0_16] : memref<1x128xf32, #tpu.memory_space<vmem>>, vector<1x128xf32>
    %20 = vector.broadcast %19 : vector<1x128xf32> to vector<8x128xf32>
    %21 = arith.addf %18, %20 : vector<8x128xf32>
    %c0_17 = arith.constant 0 : index
    %c0_18 = arith.constant 0 : index
    %22 = vector.load %arg8[%c0_17, %c0_18] : memref<8x128xf32, #tpu.memory_space<vmem>>, vector<8x128xf32>
    tpu.vector_store %arg8[%c0_17, %c0_18], %21 {strides = array<i32>} : memref<8x128xf32, #tpu.memory_space<vmem>>, vector<8x128xf32>,
    return
  }
  func.func @transform_0(%arg0: i32) -> (i32, i32) {
    %c0_i32 = arith.constant 0 : i32
    %c0_i32_0 = arith.constant 0 : i32
    return %arg0, %c0_i32 : i32, i32
  }
  func.func @transform_1(%arg0: i32) -> (i32, i32) {
    %c0_i32 = arith.constant 0 : i32
    %c0_i32_0 = arith.constant 0 : i32
    %c0_i32_1 = arith.constant 0 : i32
    return %c0_i32, %c0_i32_0 : i32, i32
  }
  func.func @transform_2(%arg0: i32) -> (i32, i32) {
    %c0_i32 = arith.constant 0 : i32
    %c0_i32_0 = arith.constant 0 : i32
    %c0_i32_1 = arith.constant 0 : i32
    return %c0_i32, %c0_i32_0 : i32, i32
  }
  func.func @transform_3(%arg0: i32) -> (i32, i32) {
    %c0_i32 = arith.constant 0 : i32
    %c0_i32_0 = arith.constant 0 : i32
    %c0_i32_1 = arith.constant 0 : i32
    return %c0_i32, %c0_i32_0 : i32, i32
  }
  func.func @transform_4(%arg0: i32) -> (i32, i32) {
    %c0_i32 = arith.constant 0 : i32
    %c0_i32_0 = arith.constant 0 : i32
    %c0_i32_1 = arith.constant 0 : i32
    return %c0_i32, %c0_i32_0 : i32, i32
  }
  func.func @transform_5(%arg0: i32) -> (i32, i32) {
    %c0_i32 = arith.constant 0 : i32
    %c0_i32_0 = arith.constant 0 : i32
    %c0_i32_1 = arith.constant 0 : i32
    return %c0_i32, %c0_i32_0 : i32, i32
  }
  func.func @transform_6(%arg0: i32) -> (i32, i32) {
    %c0_i32 = arith.constant 0 : i32
    %c0_i32_0 = arith.constant 0 : i32
    %c0_i32_1 = arith.constant 0 : i32
    return %c0_i32, %c0_i32_0 : i32, i32
  }
  func.func @transform_7(%arg0: i32) -> (i32, i32) {
    %c0_i32 = arith.constant 0 : i32
    %c0_i32_0 = arith.constant 0 : i32
    return %arg0, %c0_i32 : i32, i32
  }
}

module attributes {stable_mosaic.version = 11 : i64} {
  func.func @_decoder_kernel(%arg0: i32, %arg1: memref<8x12xf32, #tpu.memory_space<vmem>>, %arg2: memref<12x128xf32, #tpu.memory_space<vmem>>, %arg3: memref<1x128xf32, #tpu.memory_space<vmem>>, %arg4: memref<128x128xf32, #tpu.memory_space<vmem>>, %arg5: memref<1x128xf32, #tpu.memory_space<vmem>>, %arg6: memref<128x128xf32, #tpu.memory_space<vmem>>, %arg7: memref<1x128xf32, #tpu.memory_space<vmem>>, %arg8: memref<8x128xf32, #tpu.memory_space<vmem>>) attributes {dimension_semantics = [#tpu.dimension_semantics<parallel>], iteration_bounds = array<i64: 1>, scalar_prefetch = 0 : i64, scratch_operands = 0 : i64, tpu.core_type = #tpu.core_type<tc>, window_params = [{transform_indices = @transform_0, window_bounds = array<i64: 8, 12>}, {pipeline_mode = #tpu.pipeline_mode<synchronous>, transform_indices = @transform_1, window_bounds = array<i64: 12, 128>}, {pipeline_mode = #tpu.pipeline_mode<synchronous>, transform_indices = @transform_2, window_bounds = array<i64: 1, 128>}, {pipeline_mode = #tpu.pipeline_mode<synchronous>, transform_indices = @transform_3, window_bounds = array<i64: 128, 128>}, {pipeline_mode = #tpu.pipeline_mode<synchronous>, transform_indices = @transform_4, window_bounds = array<i64: 1, 128>}, {pipeline_mode = #tpu.pipeline_mode<synchronous>, transform_indices = @transform_5, window_bounds = array<i64: 128, 128>}, {pipeline_mode = #tpu.pipeline_mode<synchronous>, transform_indices = @transform_6, window_bounds = array<i64: 1, 128>}, {transform_indices = @transform_7, window_bounds = array<i64: 8, 128>}]} {
    %c0 = arith.constant 0 : index
    %c0_0 = arith.constant 0 : index
    %0 = vector.load %arg1[%c0, %c0_0] : memref<8x12xf32, #tpu.memory_space<vmem>>, vector<8x12xf32>
    %c0_1 = arith.constant 0 : index
    %c0_2 = arith.constant 0 : index
    %1 = vector.load %arg2[%c0_1, %c0_2] : memref<12x128xf32, #tpu.memory_space<vmem>>, vector<12x128xf32>
    %cst = arith.constant dense<0.000000e+00> : vector<8x128xf32>
    %2 = tpu.matmul %0, %1, %cst {dimension_numbers = #tpu.dot_dimension_numbers<[1], [0], [0], [1], [0, 0, 1, 1], [], []>} : vector<8x12xf32>, vector<12x128xf32>, vector<8x128xf32> -> vector<8x128xf32>
    %c0_3 = arith.constant 0 : index
    %c0_4 = arith.constant 0 : index
    %3 = vector.load %arg3[%c0_3, %c0_4] : memref<1x128xf32, #tpu.memory_space<vmem>>, vector<1x128xf32>
    %4 = vector.broadcast %3 : vector<1x128xf32> to vector<8x128xf32>
    %5 = arith.addf %2, %4 : vector<8x128xf32>
    %cst_5 = arith.constant 2.000000e-01 : f32
    %6 = vector.broadcast %cst_5 : f32 to vector<8x128xf32>
    %7 = arith.mulf %6, %5 : vector<8x128xf32>
    %8 = arith.maximumf %5, %7 : vector<8x128xf32>
    %c0_6 = arith.constant 0 : index
    %c0_7 = arith.constant 0 : index
    %9 = vector.load %arg4[%c0_6, %c0_7] : memref<128x128xf32, #tpu.memory_space<vmem>>, vector<128x128xf32>
    %cst_8 = arith.constant dense<0.000000e+00> : vector<8x128xf32>
    %10 = tpu.matmul %8, %9, %cst_8 {dimension_numbers = #tpu.dot_dimension_numbers<[1], [0], [0], [1], [0, 0, 1, 1], [], []>} : vector<8x128xf32>, vector<128x128xf32>, vector<8x128xf32> -> vector<8x128xf32>
    %c0_9 = arith.constant 0 : index
    %c0_10 = arith.constant 0 : index
    %11 = vector.load %arg5[%c0_9, %c0_10] : memref<1x128xf32, #tpu.memory_space<vmem>>, vector<1x128xf32>
    %12 = vector.broadcast %11 : vector<1x128xf32> to vector<8x128xf32>
    %13 = arith.addf %10, %12 : vector<8x128xf32>
    %cst_11 = arith.constant 2.000000e-01 : f32
    %14 = vector.broadcast %cst_11 : f32 to vector<8x128xf32>
    %15 = arith.mulf %14, %13 : vector<8x128xf32>
    %16 = arith.maximumf %13, %15 : vector<8x128xf32>
    %c0_12 = arith.constant 0 : index
    %c0_13 = arith.constant 0 : index
    %17 = vector.load %arg6[%c0_12, %c0_13] : memref<128x128xf32, #tpu.memory_space<vmem>>, vector<128x128xf32>
    %cst_14 = arith.constant dense<0.000000e+00> : vector<8x128xf32>
    %18 = tpu.matmul %16, %17, %cst_14 {dimension_numbers = #tpu.dot_dimension_numbers<[1], [0], [0], [1], [0, 0, 1, 1], [], []>} : vector<8x128xf32>, vector<128x128xf32>, vector<8x128xf32> -> vector<8x128xf32>
    %c0_15 = arith.constant 0 : index
    %c0_16 = arith.constant 0 : index
    %19 = vector.load %arg7[%c0_15, %c0_16] : memref<1x128xf32, #tpu.memory_space<vmem>>, vector<1x128xf32>
    %20 = vector.broadcast %19 : vector<1x128xf32> to vector<8x128xf32>
    %21 = arith.addf %18, %20 : vector<8x128xf32>
    %c0_17 = arith.constant 0 : index
    %c0_18 = arith.constant 0 : index
    %22 = vector.load %arg8[%c0_17, %c0_18] : memref<8x128xf32, #tpu.memory_space<vmem>>, vector<8x128xf32>
    tpu.vector_store %arg8[%c0_17, %c0_18], %21 {strides = array<i32>} : memref<8x128xf32, #tpu.memory_space<vmem>>, vector<8x128xf32>,
    return
  }
  func.func @transform_0(%arg0: i32) -> (i32, i32) {
    %c0_i32 = arith.constant 0 : i32
    %c0_i32_0 = arith.constant 0 : i32
    return %arg0, %c0_i32 : i32, i32
  }
  func.func @transform_1(%arg0: i32) -> (i32, i32) {
    %c0_i32 = arith.constant 0 : i32
    %c0_i32_0 = arith.constant 0 : i32
    %c0_i32_1 = arith.constant 0 : i32
    return %c0_i32, %c0_i32_0 : i32, i32
  }
  func.func @transform_2(%arg0: i32) -> (i32, i32) {
    %c0_i32 = arith.constant 0 : i32
    %c0_i32_0 = arith.constant 0 : i32
    %c0_i32_1 = arith.constant 0 : i32
    return %c0_i32, %c0_i32_0 : i32, i32
  }
  func.func @transform_3(%arg0: i32) -> (i32, i32) {
    %c0_i32 = arith.constant 0 : i32
    %c0_i32_0 = arith.constant 0 : i32
    %c0_i32_1 = arith.constant 0 : i32
    return %c0_i32, %c0_i32_0 : i32, i32
  }
  func.func @transform_4(%arg0: i32) -> (i32, i32) {
    %c0_i32 = arith.constant 0 : i32
    %c0_i32_0 = arith.constant 0 : i32
    %c0_i32_1 = arith.constant 0 : i32
    return %c0_i32, %c0_i32_0 : i32, i32
  }
  func.func @transform_5(%arg0: i32) -> (i32, i32) {
    %c0_i32 = arith.constant 0 : i32
    %c0_i32_0 = arith.constant 0 : i32
    %c0_i32_1 = arith.constant 0 : i32
    return %c0_i32, %c0_i32_0 : i32, i32
  }
  func.func @transform_6(%arg0: i32) -> (i32, i32) {
    %c0_i32 = arith.constant 0 : i32
    %c0_i32_0 = arith.constant 0 : i32
    %c0_i32_1 = arith.constant 0 : i32
    return %c0_i32, %c0_i32_0 : i32, i32
  }
  func.func @transform_7(%arg0: i32) -> (i32, i32) {
    %c0_i32 = arith.constant 0 : i32
    %c0_i32_0 = arith.constant 0 : i32
    return %arg0, %c0_i32 : i32, i32
  }
}

</mosaic_0001>

<llo_original>
// kernel: tpu_custom_call.1
$region0: #{tpu_custom_call.1}
  #allocation0 [shape = 'u32[]', space=smem, size = 0x4, offset = 0x4, fixed_abs, tag = 'smem constant byte address 0x4 - core index']
  #allocation1 [shape = 'u32[72,128]{1,0:T(1,128)}', space=vmem, size = 0x9000, scoped, tag = 'internal scratch']
  %s0 = inlined_call_operand.hbm [shape: f32[8,12], index: 0, kind: input, shape index: {}]
  %s1 = inlined_call_operand.hbm [shape: f32[12,128], index: 1, kind: input, shape index: {}]
  %s2 = inlined_call_operand.vmem [shape: f32[1,128], index: 2, kind: input, shape index: {}]
  %s3 = inlined_call_operand.hbm [shape: f32[128,128], index: 3, kind: input, shape index: {}]
  %s4 = inlined_call_operand.vmem [shape: f32[1,128], index: 4, kind: input, shape index: {}]
  %s5 = inlined_call_operand.hbm [shape: f32[128,128], index: 5, kind: input, shape index: {}]
  %s6 = inlined_call_operand.vmem [shape: f32[1,128], index: 6, kind: input, shape index: {}]
  %s7 = inlined_call_operand.hbm [shape: f32[8,128], index: 7, kind: output, shape index: {}]
  %s8 = sld [smem:[#allocation0]]
  $region54: #{tpu_custom_call.1} parent=0
    _
  %s10 = ssub.s32 1, %s8
  %s11 = scalar_select 0, %s10, %s8
  $region1: #{tpu_custom_call.1} parent=0
    #allocation2 [shape = 'u8[4096]{0}', space=vmem, size = 0x1000, scoped, tag = 'input window, operand 0, single buffered']
    #allocation3 [shape = 's32[1]{0}', space=sflag, size = 0x4, scoped, tag = 'scoped memory for tpu_custom_call.1']
    #allocation4 [shape = 's32[1]{0}', space=sflag, size = 0x4, scoped, tag = 'scoped memory for tpu_custom_call.1']
    #allocation5 [shape = 'u8[8192]{0}', space=vmem, size = 0x2000, scoped, tag = 'input window, operand 1, single buffered']
    #allocation6 [shape = 's32[1]{0}', space=sflag, size = 0x4, scoped, tag = 'scoped memory for tpu_custom_call.1']
    #allocation7 [shape = 'u8[65536]{0}', space=vmem, size = 0x10000, scoped, tag = 'input window, operand 3, single buffered']
    #allocation8 [shape = 'u8[65536]{0}', space=vmem, size = 0x10000, scoped, tag = 'input window, operand 5, single buffered']
    #allocation9 [shape = 's32[1]{0}', space=sflag, size = 0x4, scoped, tag = 'scoped memory for tpu_custom_call.1']
    #allocation10 [shape = 'u8[4096]{0}', space=vmem, size = 0x1000, scoped, tag = 'output window, operand 0, single buffered']
    %12 = vsyncpa [#allocation3], 0
    %13 = vsyncpa [#allocation6], 0
    %14 = vsyncpa [#allocation9], 0
    %15 = vsyncpa [#allocation4], 0
    // Predicated region
    $region2: #{tpu_custom_call.1} parent=1 // pred_check
      _
    $region3: #{tpu_custom_call.1} parent=1 // pred_check_branch
      %17 = sbr.rel (0) target = $region5
    $region4: #{tpu_custom_call.1} parent=1 // pred_region
      %19 = vsyncadd [#allocation3], 0
      %s21 = sshll.u32 %s0, 4
      %s22 = int_to_ptr.hbm [resolvable:$true] %s21
      %s23 = sshll.u32 [#allocation2], 4
      %s24 = int_to_ptr.vmem [resolvable:$true] %s23
      %26 = dma.hbm_to_vmem [thread:$0]  %s22, 128, %s24, [#allocation3]
    $region5: #{tpu_custom_call.1} parent=1 // pred_fallthru
      _
    // Predicated region
    $region6: #{tpu_custom_call.1} parent=1 // pred_check
      _
    $region7: #{tpu_custom_call.1} parent=1 // pred_check_branch
      %28 = sbr.rel (0) target = $region9
    $region8: #{tpu_custom_call.1} parent=1 // pred_region
      %30 = vsyncadd [#allocation6], 0
      %s31 = sshll.u32 %s1, 4
      %s32 = int_to_ptr.hbm [resolvable:$true] %s31
      %s33 = sshll.u32 [#allocation5], 4
      %s34 = int_to_ptr.vmem [resolvable:$true] %s33
      %39 = dma.hbm_to_vmem [thread:$0]  %s32, 256, %s34, [#allocation6], 128, 128, 8
    $region9: #{tpu_custom_call.1} parent=1 // pred_fallthru
      _
    // Predicated region
    $region10: #{tpu_custom_call.1} parent=1 // pred_check
      _
    $region11: #{tpu_custom_call.1} parent=1 // pred_check_branch
      %41 = sbr.rel (0) target = $region13
    $region12: #{tpu_custom_call.1} parent=1 // pred_region
      _
    $region13: #{tpu_custom_call.1} parent=1 // pred_fallthru
      _
    // Predicated region
    $region14: #{tpu_custom_call.1} parent=1 // pred_check
      _
    $region15: #{tpu_custom_call.1} parent=1 // pred_check_branch
      %43 = sbr.rel (0) target = $region17
    $region16: #{tpu_custom_call.1} parent=1 // pred_region
      %45 = vsyncadd [#allocation6], 0
      %s46 = sshll.u32 %s3, 4
      %s47 = int_to_ptr.hbm [resolvable:$true] %s46
      %s48 = sshll.u32 [#allocation7], 4
      %s49 = int_to_ptr.vmem [resolvable:$true] %s48
      %54 = dma.hbm_to_vmem [thread:$0]  %s47, 2048, %s49, [#allocation6], 128, 128, 8
    $region17: #{tpu_custom_call.1} parent=1 // pred_fallthru
      _
    // Predicated region
    $region18: #{tpu_custom_call.1} parent=1 // pred_check
      _
    $region19: #{tpu_custom_call.1} parent=1 // pred_check_branch
      %56 = sbr.rel (0) target = $region21
    $region20: #{tpu_custom_call.1} parent=1 // pred_region
      _
    $region21: #{tpu_custom_call.1} parent=1 // pred_fallthru
      _
    // Predicated region
    $region22: #{tpu_custom_call.1} parent=1 // pred_check
      _
    $region23: #{tpu_custom_call.1} parent=1 // pred_check_branch
      %58 = sbr.rel (0) target = $region25
    $region24: #{tpu_custom_call.1} parent=1 // pred_region
      %60 = vsyncadd [#allocation9], 0
      %s61 = sshll.u32 %s5, 4
      %s62 = int_to_ptr.hbm [resolvable:$true] %s61
      %s63 = sshll.u32 [#allocation8], 4
      %s64 = int_to_ptr.vmem [resolvable:$true] %s63
      %69 = dma.hbm_to_vmem [thread:$0]  %s62, 2048, %s64, [#allocation9], 128, 128, 8
    $region25: #{tpu_custom_call.1} parent=1 // pred_fallthru
      _
    // Predicated region
    $region26: #{tpu_custom_call.1} parent=1 // pred_check
      _
    $region27: #{tpu_custom_call.1} parent=1 // pred_check_branch
      %71 = sbr.rel (0) target = $region29
    $region28: #{tpu_custom_call.1} parent=1 // pred_region
      _
    $region29: #{tpu_custom_call.1} parent=1 // pred_fallthru
      _
    // Predicated region
    $region30: #{tpu_custom_call.1} parent=1 // pred_check
      _
    $region31: #{tpu_custom_call.1} parent=1 // pred_check_branch
      %73 = sbr.rel (0) target = $region33
    $region32: #{tpu_custom_call.1} parent=1 // pred_region
      %75 = dma.done [#allocation3], 128
    $region33: #{tpu_custom_call.1} parent=1 // pred_fallthru
      _
    // Predicated region
    $region34: #{tpu_custom_call.1} parent=1 // pred_check
      _
    $region35: #{tpu_custom_call.1} parent=1 // pred_check_branch
      %77 = sbr.rel (0) target = $region37
    $region36: #{tpu_custom_call.1} parent=1 // pred_region
      %79 = dma.done [#allocation6], 256
    $region37: #{tpu_custom_call.1} parent=1 // pred_fallthru
      _
    // Predicated region
    $region38: #{tpu_custom_call.1} parent=1 // pred_check
      _
    $region39: #{tpu_custom_call.1} parent=1 // pred_check_branch
      %81 = sbr.rel (0) target = $region41
    $region40: #{tpu_custom_call.1} parent=1 // pred_region
      %83 = dma.done [#allocation6], 2048
    $region41: #{tpu_custom_call.1} parent=1 // pred_fallthru
      _
    // Predicated region
    $region42: #{tpu_custom_call.1} parent=1 // pred_check
      _
    $region43: #{tpu_custom_call.1} parent=1 // pred_check_branch
      %85 = sbr.rel (0) target = $region45
    $region44: #{tpu_custom_call.1} parent=1 // pred_region
      %87 = dma.done [#allocation9], 2048
    $region45: #{tpu_custom_call.1} parent=1 // pred_fallthru
      _
    %v88 = vld [vmem:[#allocation2] sm:$0xff]
    %v89 = vld [vmem:[#allocation5] sm:$0xff]
    %v90 = vld [vmem:[#allocation5 + $0x8] sm:$0xf]
    %v91 = vld [vmem:[%s2] sm:$0x1]
    %v93 = vperm.slane %v91, 0
    %vm95 = vcmask 97280
    %v97 = vsel %vm95, %v88, 0
    %vm99 = vcmask 1043456
    %v101 = vsel %vm99, %v90, 0
    %103 = vmatpush.msra.mxu0 0.0
    %104 = vmatpush.msra.mxu0 0.0
    %105 = vmatpush.msra.mxu0 0.0
    %106 = vmatpush.msra.mxu0 0.0
    %107 = vmatpush.msra.mxu0 0.0
    %108 = vmatpush.msra.mxu0 0.0
    %109 = vmatpush.msra.mxu0 0.0
    %110 = vmatpush.msra.mxu0 0.0
    %111 = vmatpush.msra.mxu0 0.0
    %112 = vmatpush.msra.mxu0 0.0
    %113 = vmatpush.msra.mxu0 0.0
    %114 = vmatpush.msra.mxu0 0.0
    %115 = vmatpush.msra.mxu0 0.0
    %116 = vmatpush.msra.mxu0 0.0
    %117 = vmatpush.msra.mxu0 %v101
    %118 = vmatpush.msra.mxu0 %v89
    %119 = vmatmul.f32.gmra.mxu0 %v97
    %v120 = vpop.f32.mrf.mxu0
    %v121 = vadd.f32 %v93, %v120
    %122 = vdwg.mxu0
    %v123 = vmul.f32 %v121, 0.2
    %v124 = vmax.f32 %v121, %v123
    %v125 = vld [vmem:[#allocation7] sm:$0xff]
    %v126 = vld [vmem:[#allocation7 + $0x8] sm:$0xff]
    %v127 = vld [vmem:[#allocation7 + $0x10] sm:$0xff]
    %v128 = vld [vmem:[#allocation7 + $0x18] sm:$0xff]
    %v129 = vld [vmem:[#allocation7 + $0x20] sm:$0xff]
    %v130 = vld [vmem:[#allocation7 + $0x28] sm:$0xff]
    %v131 = vld [vmem:[#allocation7 + $0x30] sm:$0xff]
    %v132 = vld [vmem:[#allocation7 + $0x38] sm:$0xff]
    %v133 = vld [vmem:[#allocation7 + $0x40] sm:$0xff]
    %v134 = vld [vmem:[#allocation7 + $0x48] sm:$0xff]
    %v135 = vld [vmem:[#allocation7 + $0x50] sm:$0xff]
    %v136 = vld [vmem:[#allocation7 + $0x58] sm:$0xff]
    %v137 = vld [vmem:[#allocation7 + $0x60] sm:$0xff]
    %v138 = vld [vmem:[#allocation7 + $0x68] sm:$0xff]
    %v139 = vld [vmem:[#allocation7 + $0x70] sm:$0xff]
    %v140 = vld [vmem:[#allocation7 + $0x78] sm:$0xff]
    %v141 = vld [vmem:[%s4] sm:$0x1]
    %v143 = vperm.slane %v141, 0
    %145 = vmatpush.msra.mxu0 %v140
    %146 = vmatpush.msra.mxu0 %v139
    %147 = vmatpush.msra.mxu0 %v138
    %148 = vmatpush.msra.mxu0 %v137
    %149 = vmatpush.msra.mxu0 %v136
    %150 = vmatpush.msra.mxu0 %v135
    %151 = vmatpush.msra.mxu0 %v134
    %152 = vmatpush.msra.mxu0 %v133
    %153 = vmatpush.msra.mxu0 %v132
    %154 = vmatpush.msra.mxu0 %v131
    %155 = vmatpush.msra.mxu0 %v130
    %156 = vmatpush.msra.mxu0 %v129
    %157 = vmatpush.msra.mxu0 %v128
    %158 = vmatpush.msra.mxu0 %v127
    %159 = vmatpush.msra.mxu0 %v126
    %160 = vmatpush.msra.mxu0 %v125
    %161 = vmatmul.f32.gmra.mxu0 %v124
    %v162 = vpop.f32.mrf.mxu0
    %v163 = vadd.f32 %v143, %v162
    %164 = vdwg.mxu0
    %v165 = vmul.f32 %v163, 0.2
    %v166 = vmax.f32 %v163, %v165
    %v167 = vld [vmem:[#allocation8] sm:$0xff]
    %v168 = vld [vmem:[#allocation8 + $0x8] sm:$0xff]
    %v169 = vld [vmem:[#allocation8 + $0x10] sm:$0xff]
    %v170 = vld [vmem:[#allocation8 + $0x18] sm:$0xff]
    %v171 = vld [vmem:[#allocation8 + $0x20] sm:$0xff]
    %v172 = vld [vmem:[#allocation8 + $0x28] sm:$0xff]
    %v173 = vld [vmem:[#allocation8 + $0x30] sm:$0xff]
    %v174 = vld [vmem:[#allocation8 + $0x38] sm:$0xff]
    %v175 = vld [vmem:[#allocation8 + $0x40] sm:$0xff]
    %v176 = vld [vmem:[#allocation8 + $0x48] sm:$0xff]
    %v177 = vld [vmem:[#allocation8 + $0x50] sm:$0xff]
    %v178 = vld [vmem:[#allocation8 + $0x58] sm:$0xff]
    %v179 = vld [vmem:[#allocation8 + $0x60] sm:$0xff]
    %v180 = vld [vmem:[#allocation8 + $0x68] sm:$0xff]
    %v181 = vld [vmem:[#allocation8 + $0x70] sm:$0xff]
    %v182 = vld [vmem:[#allocation8 + $0x78] sm:$0xff]
    %v183 = vld [vmem:[%s6] sm:$0x1]
    %v185 = vperm.slane %v183, 0
    %187 = vmatpush.msra.mxu0 %v182
    %188 = vmatpush.msra.mxu0 %v181
    %189 = vmatpush.msra.mxu0 %v180
    %190 = vmatpush.msra.mxu0 %v179
    %191 = vmatpush.msra.mxu0 %v178
    %192 = vmatpush.msra.mxu0 %v177
    %193 = vmatpush.msra.mxu0 %v176
    %194 = vmatpush.msra.mxu0 %v175
    %195 = vmatpush.msra.mxu0 %v174
    %196 = vmatpush.msra.mxu0 %v173
    %197 = vmatpush.msra.mxu0 %v172
    %198 = vmatpush.msra.mxu0 %v171
    %199 = vmatpush.msra.mxu0 %v170
    %200 = vmatpush.msra.mxu0 %v169
    %201 = vmatpush.msra.mxu0 %v168
    %202 = vmatpush.msra.mxu0 %v167
    %203 = vmatmul.f32.gmra.mxu0 %v166
    %v204 = vpop.f32.mrf.mxu0
    %v205 = vadd.f32 %v185, %v204
    %206 = vdwg.mxu0
    %207 = vst [vmem:[#allocation10] sm:$0xff] %v205
    // Predicated region
    $region46: #{tpu_custom_call.1} parent=1 // pred_check
      _
    $region47: #{tpu_custom_call.1} parent=1 // pred_check_branch
      %209 = sbr.rel (0) target = $region49
    $region48: #{tpu_custom_call.1} parent=1 // pred_region
      %211 = vsyncadd [#allocation4], 0
      %s213 = sshll.u32 [#allocation10], 4
      %s214 = int_to_ptr.vmem [resolvable:$true] %s213
      %s215 = sshll.u32 %s7, 4
      %s216 = int_to_ptr.hbm [resolvable:$true] %s215
      %218 = dma.vmem_to_hbm [thread:$0]  %s214, 128, %s216, [#allocation4]
    $region49: #{tpu_custom_call.1} parent=1 // pred_fallthru
      _
    // Predicated region
    $region50: #{tpu_custom_call.1} parent=1 // pred_check
      _
    $region51: #{tpu_custom_call.1} parent=1 // pred_check_branch
      %220 = sbr.rel (0) target = $region53
    $region52: #{tpu_custom_call.1} parent=1 // pred_region
      %222 = dma.done [#allocation4], 128
    $region53: #{tpu_custom_call.1} parent=1 // pred_fallthru
      _
    %223 = vsyncpa [#allocation3], 1
    %224 = vsyncpa [#allocation6], 1
    %225 = vsyncpa [#allocation9], 1
    %226 = vsyncpa [#allocation4], 1

// kernel: tpu_custom_call.1
$region0: #{tpu_custom_call.1}
  #allocation0 [shape = 'u32[]', space=smem, size = 0x4, offset = 0x4, fixed_abs, tag = 'smem constant byte address 0x4 - core index']
  #allocation1 [shape = 'u32[72,128]{1,0:T(1,128)}', space=vmem, size = 0x9000, scoped, tag = 'internal scratch']
  %s0 = inlined_call_operand.hbm [shape: f32[8,12], index: 0, kind: input, shape index: {}]
  %s1 = inlined_call_operand.hbm [shape: f32[12,128], index: 1, kind: input, shape index: {}]
  %s2 = inlined_call_operand.vmem [shape: f32[1,128], index: 2, kind: input, shape index: {}]
  %s3 = inlined_call_operand.hbm [shape: f32[128,128], index: 3, kind: input, shape index: {}]
  %s4 = inlined_call_operand.vmem [shape: f32[1,128], index: 4, kind: input, shape index: {}]
  %s5 = inlined_call_operand.hbm [shape: f32[128,128], index: 5, kind: input, shape index: {}]
  %s6 = inlined_call_operand.vmem [shape: f32[1,128], index: 6, kind: input, shape index: {}]
  %s7 = inlined_call_operand.hbm [shape: f32[8,128], index: 7, kind: output, shape index: {}]
  %s8 = sld [smem:[#allocation0]]
  $region54: #{tpu_custom_call.1} parent=0
    _
  %s10 = ssub.s32 1, %s8
  %s11 = scalar_select 0, %s10, %s8
  $region1: #{tpu_custom_call.1} parent=0
    #allocation2 [shape = 'u8[4096]{0}', space=vmem, size = 0x1000, scoped, tag = 'input window, operand 0, single buffered']
    #allocation3 [shape = 's32[1]{0}', space=sflag, size = 0x4, scoped, tag = 'scoped memory for tpu_custom_call.1']
    #allocation4 [shape = 's32[1]{0}', space=sflag, size = 0x4, scoped, tag = 'scoped memory for tpu_custom_call.1']
    #allocation5 [shape = 'u8[8192]{0}', space=vmem, size = 0x2000, scoped, tag = 'input window, operand 1, single buffered']
    #allocation6 [shape = 's32[1]{0}', space=sflag, size = 0x4, scoped, tag = 'scoped memory for tpu_custom_call.1']
    #allocation7 [shape = 'u8[65536]{0}', space=vmem, size = 0x10000, scoped, tag = 'input window, operand 3, single buffered']
    #allocation8 [shape = 'u8[65536]{0}', space=vmem, size = 0x10000, scoped, tag = 'input window, operand 5, single buffered']
    #allocation9 [shape = 's32[1]{0}', space=sflag, size = 0x4, scoped, tag = 'scoped memory for tpu_custom_call.1']
    #allocation10 [shape = 'u8[4096]{0}', space=vmem, size = 0x1000, scoped, tag = 'output window, operand 0, single buffered']
    %12 = vsyncpa [#allocation3], 0
    %13 = vsyncpa [#allocation6], 0
    %14 = vsyncpa [#allocation9], 0
    %15 = vsyncpa [#allocation4], 0
    // Predicated region
    $region2: #{tpu_custom_call.1} parent=1 // pred_check
      _
    $region3: #{tpu_custom_call.1} parent=1 // pred_check_branch
      %17 = sbr.rel (0) target = $region5
    $region4: #{tpu_custom_call.1} parent=1 // pred_region
      %19 = vsyncadd [#allocation3], 0
      %s21 = sshll.u32 %s0, 4
      %s22 = int_to_ptr.hbm [resolvable:$true] %s21
      %s23 = sshll.u32 [#allocation2], 4
      %s24 = int_to_ptr.vmem [resolvable:$true] %s23
      %26 = dma.hbm_to_vmem [thread:$0]  %s22, 128, %s24, [#allocation3]
    $region5: #{tpu_custom_call.1} parent=1 // pred_fallthru
      _
    // Predicated region
    $region6: #{tpu_custom_call.1} parent=1 // pred_check
      _
    $region7: #{tpu_custom_call.1} parent=1 // pred_check_branch
      %28 = sbr.rel (0) target = $region9
    $region8: #{tpu_custom_call.1} parent=1 // pred_region
      %30 = vsyncadd [#allocation6], 0
      %s31 = sshll.u32 %s1, 4
      %s32 = int_to_ptr.hbm [resolvable:$true] %s31
      %s33 = sshll.u32 [#allocation5], 4
      %s34 = int_to_ptr.vmem [resolvable:$true] %s33
      %39 = dma.hbm_to_vmem [thread:$0]  %s32, 256, %s34, [#allocation6], 128, 128, 8
    $region9: #{tpu_custom_call.1} parent=1 // pred_fallthru
      _
    // Predicated region
    $region10: #{tpu_custom_call.1} parent=1 // pred_check
      _
    $region11: #{tpu_custom_call.1} parent=1 // pred_check_branch
      %41 = sbr.rel (0) target = $region13
    $region12: #{tpu_custom_call.1} parent=1 // pred_region
      _
    $region13: #{tpu_custom_call.1} parent=1 // pred_fallthru
      _
    // Predicated region
    $region14: #{tpu_custom_call.1} parent=1 // pred_check
      _
    $region15: #{tpu_custom_call.1} parent=1 // pred_check_branch
      %43 = sbr.rel (0) target = $region17
    $region16: #{tpu_custom_call.1} parent=1 // pred_region
      %45 = vsyncadd [#allocation6], 0
      %s46 = sshll.u32 %s3, 4
      %s47 = int_to_ptr.hbm [resolvable:$true] %s46
      %s48 = sshll.u32 [#allocation7], 4
      %s49 = int_to_ptr.vmem [resolvable:$true] %s48
      %54 = dma.hbm_to_vmem [thread:$0]  %s47, 2048, %s49, [#allocation6], 128, 128, 8
    $region17: #{tpu_custom_call.1} parent=1 // pred_fallthru
      _
    // Predicated region
    $region18: #{tpu_custom_call.1} parent=1 // pred_check
      _
    $region19: #{tpu_custom_call.1} parent=1 // pred_check_branch
      %56 = sbr.rel (0) target = $region21
    $region20: #{tpu_custom_call.1} parent=1 // pred_region
      _
    $region21: #{tpu_custom_call.1} parent=1 // pred_fallthru
      _
    // Predicated region
    $region22: #{tpu_custom_call.1} parent=1 // pred_check
      _
    $region23: #{tpu_custom_call.1} parent=1 // pred_check_branch
      %58 = sbr.rel (0) target = $region25
    $region24: #{tpu_custom_call.1} parent=1 // pred_region
      %60 = vsyncadd [#allocation9], 0
      %s61 = sshll.u32 %s5, 4
      %s62 = int_to_ptr.hbm [resolvable:$true] %s61
      %s63 = sshll.u32 [#allocation8], 4
      %s64 = int_to_ptr.vmem [resolvable:$true] %s63
      %69 = dma.hbm_to_vmem [thread:$0]  %s62, 2048, %s64, [#allocation9], 128, 128, 8
    $region25: #{tpu_custom_call.1} parent=1 // pred_fallthru
      _
    // Predicated region
    $region26: #{tpu_custom_call.1} parent=1 // pred_check
      _
    $region27: #{tpu_custom_call.1} parent=1 // pred_check_branch
      %71 = sbr.rel (0) target = $region29
    $region28: #{tpu_custom_call.1} parent=1 // pred_region
      _
    $region29: #{tpu_custom_call.1} parent=1 // pred_fallthru
      _
    // Predicated region
    $region30: #{tpu_custom_call.1} parent=1 // pred_check
      _
    $region31: #{tpu_custom_call.1} parent=1 // pred_check_branch
      %73 = sbr.rel (0) target = $region33
    $region32: #{tpu_custom_call.1} parent=1 // pred_region
      %75 = dma.done [#allocation3], 128
    $region33: #{tpu_custom_call.1} parent=1 // pred_fallthru
      _
    // Predicated region
    $region34: #{tpu_custom_call.1} parent=1 // pred_check
      _
    $region35: #{tpu_custom_call.1} parent=1 // pred_check_branch
      %77 = sbr.rel (0) target = $region37
    $region36: #{tpu_custom_call.1} parent=1 // pred_region
      %79 = dma.done [#allocation6], 256
    $region37: #{tpu_custom_call.1} parent=1 // pred_fallthru
      _
    // Predicated region
    $region38: #{tpu_custom_call.1} parent=1 // pred_check
      _
    $region39: #{tpu_custom_call.1} parent=1 // pred_check_branch
      %81 = sbr.rel (0) target = $region41
    $region40: #{tpu_custom_call.1} parent=1 // pred_region
      %83 = dma.done [#allocation6], 2048
    $region41: #{tpu_custom_call.1} parent=1 // pred_fallthru
      _
    // Predicated region
    $region42: #{tpu_custom_call.1} parent=1 // pred_check
      _
    $region43: #{tpu_custom_call.1} parent=1 // pred_check_branch
      %85 = sbr.rel (0) target = $region45
    $region44: #{tpu_custom_call.1} parent=1 // pred_region
      %87 = dma.done [#allocation9], 2048
    $region45: #{tpu_custom_call.1} parent=1 // pred_fallthru
      _
    %v88 = vld [vmem:[#allocation2] sm:$0xff]
    %v89 = vld [vmem:[#allocation5] sm:$0xff]
    %v90 = vld [vmem:[#allocation5 + $0x8] sm:$0xf]
    %v91 = vld [vmem:[%s2] sm:$0x1]
    %v93 = vperm.slane %v91, 0
    %vm95 = vcmask 97280
    %v97 = vsel %vm95, %v88, 0
    %vm99 = vcmask 1043456
    %v101 = vsel %vm99, %v90, 0
    %103 = vmatpush.msra.mxu0 0.0
    %104 = vmatpush.msra.mxu0 0.0
    %105 = vmatpush.msra.mxu0 0.0
    %106 = vmatpush.msra.mxu0 0.0
    %107 = vmatpush.msra.mxu0 0.0
    %108 = vmatpush.msra.mxu0 0.0
    %109 = vmatpush.msra.mxu0 0.0
    %110 = vmatpush.msra.mxu0 0.0
    %111 = vmatpush.msra.mxu0 0.0
    %112 = vmatpush.msra.mxu0 0.0
    %113 = vmatpush.msra.mxu0 0.0
    %114 = vmatpush.msra.mxu0 0.0
    %115 = vmatpush.msra.mxu0 0.0
    %116 = vmatpush.msra.mxu0 0.0
    %117 = vmatpush.msra.mxu0 %v101
    %118 = vmatpush.msra.mxu0 %v89
    %119 = vmatmul.f32.gmra.mxu0 %v97
    %v120 = vpop.f32.mrf.mxu0
    %v121 = vadd.f32 %v93, %v120
    %122 = vdwg.mxu0
    %v123 = vmul.f32 %v121, 0.2
    %v124 = vmax.f32 %v121, %v123
    %v125 = vld [vmem:[#allocation7] sm:$0xff]
    %v126 = vld [vmem:[#allocation7 + $0x8] sm:$0xff]
    %v127 = vld [vmem:[#allocation7 + $0x10] sm:$0xff]
    %v128 = vld [vmem:[#allocation7 + $0x18] sm:$0xff]
    %v129 = vld [vmem:[#allocation7 + $0x20] sm:$0xff]
    %v130 = vld [vmem:[#allocation7 + $0x28] sm:$0xff]
    %v131 = vld [vmem:[#allocation7 + $0x30] sm:$0xff]
    %v132 = vld [vmem:[#allocation7 + $0x38] sm:$0xff]
    %v133 = vld [vmem:[#allocation7 + $0x40] sm:$0xff]
    %v134 = vld [vmem:[#allocation7 + $0x48] sm:$0xff]
    %v135 = vld [vmem:[#allocation7 + $0x50] sm:$0xff]
    %v136 = vld [vmem:[#allocation7 + $0x58] sm:$0xff]
    %v137 = vld [vmem:[#allocation7 + $0x60] sm:$0xff]
    %v138 = vld [vmem:[#allocation7 + $0x68] sm:$0xff]
    %v139 = vld [vmem:[#allocation7 + $0x70] sm:$0xff]
    %v140 = vld [vmem:[#allocation7 + $0x78] sm:$0xff]
    %v141 = vld [vmem:[%s4] sm:$0x1]
    %v143 = vperm.slane %v141, 0
    %145 = vmatpush.msra.mxu0 %v140
    %146 = vmatpush.msra.mxu0 %v139
    %147 = vmatpush.msra.mxu0 %v138
    %148 = vmatpush.msra.mxu0 %v137
    %149 = vmatpush.msra.mxu0 %v136
    %150 = vmatpush.msra.mxu0 %v135
    %151 = vmatpush.msra.mxu0 %v134
    %152 = vmatpush.msra.mxu0 %v133
    %153 = vmatpush.msra.mxu0 %v132
    %154 = vmatpush.msra.mxu0 %v131
    %155 = vmatpush.msra.mxu0 %v130
    %156 = vmatpush.msra.mxu0 %v129
    %157 = vmatpush.msra.mxu0 %v128
    %158 = vmatpush.msra.mxu0 %v127
    %159 = vmatpush.msra.mxu0 %v126
    %160 = vmatpush.msra.mxu0 %v125
    %161 = vmatmul.f32.gmra.mxu0 %v124
    %v162 = vpop.f32.mrf.mxu0
    %v163 = vadd.f32 %v143, %v162
    %164 = vdwg.mxu0
    %v165 = vmul.f32 %v163, 0.2
    %v166 = vmax.f32 %v163, %v165
    %v167 = vld [vmem:[#allocation8] sm:$0xff]
    %v168 = vld [vmem:[#allocation8 + $0x8] sm:$0xff]
    %v169 = vld [vmem:[#allocation8 + $0x10] sm:$0xff]
    %v170 = vld [vmem:[#allocation8 + $0x18] sm:$0xff]
    %v171 = vld [vmem:[#allocation8 + $0x20] sm:$0xff]
    %v172 = vld [vmem:[#allocation8 + $0x28] sm:$0xff]
    %v173 = vld [vmem:[#allocation8 + $0x30] sm:$0xff]
    %v174 = vld [vmem:[#allocation8 + $0x38] sm:$0xff]
    %v175 = vld [vmem:[#allocation8 + $0x40] sm:$0xff]
    %v176 = vld [vmem:[#allocation8 + $0x48] sm:$0xff]
    %v177 = vld [vmem:[#allocation8 + $0x50] sm:$0xff]
    %v178 = vld [vmem:[#allocation8 + $0x58] sm:$0xff]
    %v179 = vld [vmem:[#allocation8 + $0x60] sm:$0xff]
    %v180 = vld [vmem:[#allocation8 + $0x68] sm:$0xff]
    %v181 = vld [vmem:[#allocation8 + $0x70] sm:$0xff]
    %v182 = vld [vmem:[#allocation8 + $0x78] sm:$0xff]
    %v183 = vld [vmem:[%s6] sm:$0x1]
    %v185 = vperm.slane %v183, 0
    %187 = vmatpush.msra.mxu0 %v182
    %188 = vmatpush.msra.mxu0 %v181
    %189 = vmatpush.msra.mxu0 %v180
    %190 = vmatpush.msra.mxu0 %v179
    %191 = vmatpush.msra.mxu0 %v178
    %192 = vmatpush.msra.mxu0 %v177
    %193 = vmatpush.msra.mxu0 %v176
    %194 = vmatpush.msra.mxu0 %v175
    %195 = vmatpush.msra.mxu0 %v174
    %196 = vmatpush.msra.mxu0 %v173
    %197 = vmatpush.msra.mxu0 %v172
    %198 = vmatpush.msra.mxu0 %v171
    %199 = vmatpush.msra.mxu0 %v170
    %200 = vmatpush.msra.mxu0 %v169
    %201 = vmatpush.msra.mxu0 %v168
    %202 = vmatpush.msra.mxu0 %v167
    %203 = vmatmul.f32.gmra.mxu0 %v166
    %v204 = vpop.f32.mrf.mxu0
    %v205 = vadd.f32 %v185, %v204
    %206 = vdwg.mxu0
    %207 = vst [vmem:[#allocation10] sm:$0xff] %v205
    // Predicated region
    $region46: #{tpu_custom_call.1} parent=1 // pred_check
      _
    $region47: #{tpu_custom_call.1} parent=1 // pred_check_branch
      %209 = sbr.rel (0) target = $region49
    $region48: #{tpu_custom_call.1} parent=1 // pred_region
      %211 = vsyncadd [#allocation4], 0
      %s213 = sshll.u32 [#allocation10], 4
      %s214 = int_to_ptr.vmem [resolvable:$true] %s213
      %s215 = sshll.u32 %s7, 4
      %s216 = int_to_ptr.hbm [resolvable:$true] %s215
      %218 = dma.vmem_to_hbm [thread:$0]  %s214, 128, %s216, [#allocation4]
    $region49: #{tpu_custom_call.1} parent=1 // pred_fallthru
      _
    // Predicated region
    $region50: #{tpu_custom_call.1} parent=1 // pred_check
      _
    $region51: #{tpu_custom_call.1} parent=1 // pred_check_branch
      %220 = sbr.rel (0) target = $region53
    $region52: #{tpu_custom_call.1} parent=1 // pred_region
      %222 = dma.done [#allocation4], 128
    $region53: #{tpu_custom_call.1} parent=1 // pred_fallthru
      _
    %223 = vsyncpa [#allocation3], 1
    %224 = vsyncpa [#allocation6], 1
    %225 = vsyncpa [#allocation9], 1
    %226 = vsyncpa [#allocation4], 1

</llo_original>
